<compile_context>
chip_gen: v5e
topology: v5e:2x2
jax: 0.10.0
libtpu: 0.0.40
codegen_flags: <defaults>
</compile_context>

<pallas_src>
import functools

import jax
import jax.numpy as jnp
from jax import lax
from jax.experimental import pallas as pl
from jax.experimental.pallas import tpu as pltpu


# -----------------------------------------------------------------------------
# Fused kernel. Rows everywhere are ordered (t, b) -> row index t*B + b.
# Gate/lane layout of all 6Hd-wide tensors: [fr | br | fz | bz | fn | bn].
# -----------------------------------------------------------------------------
def fused_gru_head_kernel(
        xcat_ref,      # [N, 2H]    row t*B+b = [ x(t,b) | x(S-1-t,b) ]
        wpack_ref,     # [2H+2Hd, 6Hd]  rows 0:2H = block-diag W_ih^T,
                       #                 rows 2H:  = block-diag W_hh^T
        bias_ref,      # [1, 8Hd]   cols 0:6Hd = folded gate bias,
                       #            cols 6Hd:8Hd = b_hh of the n gates (f|b)
        woutb_ref,     # [2Hd+1, TP] rows 0:2Hd = W_out^T (lane-padded),
                       #             row  2Hd   = b_out (-1e30 on padded lanes)
        label_ref,     # [N, 1] int32
        stats_ref,     # [1, 2] f32  (loss, correct)
        predict_ref,   # [N, 1] int32
        *, S, B, T, eps):
    N, H2 = xcat_ref.shape                    # H2 = 2H
    G = wpack_ref.shape[1]                    # G = 6*Hd
    Hd = G // 6
    TP = woutb_ref.shape[1]

    # ---- loop-invariant loads / hoisted broadcasts --------------------------
    wih = wpack_ref[0:H2, :]                          # [2H, 6Hd]
    whh = wpack_ref[H2:H2 + 2 * Hd, :]                # [2Hd, 6Hd]
    bi = bias_ref[:, 0:6 * Hd]                        # [1, 6Hd]
    bhhn = jnp.broadcast_to(bias_ref[:, 6 * Hd:8 * Hd], (B, 2 * Hd))

    # ---- input projection: ALL steps, BOTH directions, ALL gates, one matmul
    gi_all = jnp.dot(xcat_ref[...], wih,
                     preferred_element_type=jnp.float32) + bi        # [N, 6Hd]

    # ---- bidirectional recurrence (serial path: 1 MXU op / step) ------------
    h_cat = jnp.zeros((B, 2 * Hd), jnp.float32)       # [hf | hb]
    h_steps = []
    for t in range(S):                                 # fully unrolled, static
        r0 = t * B
        gi = gi_all[r0:r0 + B, :]                      # [B, 6Hd] single slice
        gh = jnp.dot(h_cat, whh, preferred_element_type=jnp.float32)
        rz = jax.nn.sigmoid(gi[:, 0:4 * Hd] + gh[:, 0:4 * Hd])
        r = rz[:, 0:2 * Hd]                            # [rf | rb]
        z = rz[:, 2 * Hd:4 * Hd]                       # [zf | zb]
        n = jnp.tanh(gi[:, 4 * Hd:6 * Hd]
                     + r * (gh[:, 4 * Hd:6 * Hd] + bhhn))
        h_cat = (1.0 - z) * n + z * h_cat
        h_steps.append(h_cat)

    # ---- re-assemble rnn output rows (bwd half is time-reversed) ------------
    # row t = [ hf(t) | hb(t) ];  hb(t) lives in the bwd half of step S-1-t.
    lane = lax.broadcasted_iota(jnp.int32, (B, 2 * Hd), 1)
    fwd_lane = lane < Hd
    rows = [jnp.where(fwd_lane, h_steps[t], h_steps[S - 1 - t])
            for t in range(S)]
    rnn_out = jnp.concatenate(rows, axis=0)            # [N, 2Hd]

    # ---------------------------- classification head ------------------------
    woutT = woutb_ref[0:2 * Hd, :]                     # [2Hd, TP]
    bout = woutb_ref[2 * Hd:2 * Hd + 1, :]             # [1, TP]
    logits = jnp.dot(rnn_out, woutT,
                     preferred_element_type=jnp.float32) + bout       # [N, TP]

    # log_softmax (padded lanes carry -1e30 bias -> exp underflows to 0)
    m = jnp.max(logits, axis=-1, keepdims=True)
    lse = m + jnp.log(jnp.sum(jnp.exp(logits - m), axis=-1, keepdims=True))
    logp = logits - lse

    label = label_ref[...]                                        # [N, 1]
    iota = lax.broadcasted_iota(jnp.int32, (N, TP), 1)
    one_hot = (iota == label).astype(jnp.float32)                 # labels < T
    valid = (iota < T).astype(jnp.float32)                        # mask pad lanes
    smooth = (1.0 - eps) * one_hot + (eps / T) * valid
    per_tok = -jnp.sum(logp * smooth, axis=-1, keepdims=True)     # [N, 1]
    mask = (label > 0).astype(jnp.float32)

    loss = jnp.sum(mask * per_tok, keepdims=True)                 # (1, 1)

    # first-index argmax (matches the reference tie-break)
    maxv = jnp.max(logp, axis=-1, keepdims=True)
    cand = jnp.where(logp == maxv, iota, TP)
    pred = jnp.min(cand, axis=-1, keepdims=True).astype(jnp.int32)
    correct = jnp.sum(mask * (pred == label).astype(jnp.float32),
                      keepdims=True)                              # (1, 1)

    stats_ref[...] = jnp.concatenate([loss, correct], axis=1)     # (1, 2)
    # TODO(synk): a [1, N] lane-dense predict would need an in-kernel [N,1]
    #             transpose that costs more than it saves at N=16.
    predict_ref[...] = pred


# -----------------------------------------------------------------------------
# Glue (plain JAX): word embedding (word + position + LayerNorm, eval dropout),
# block-diagonal weight packing, and the single fused pallas_call.
# -----------------------------------------------------------------------------
def embed(src, p):
    B, S = src.shape
    x = p["word_emb"][src] + p["pos_emb"][:S][None, :, :]     # [B, S, H]
    mu = jnp.mean(x, axis=-1, keepdims=True)
    var = jnp.mean((x - mu) ** 2, axis=-1, keepdims=True)
    x = (x - mu) / jnp.sqrt(var + 1e-6)
    return x * p["ln_gamma"] + p["ln_beta"]


def only_gru_forward(src, label, params, tagset_size, eps=0.1):
    B, S = src.shape
    emb = embed(src, params)                                  # [B, S, H]
    H = emb.shape[-1]
    Hd = H // 2
    G = 6 * Hd
    N = B * S
    T = tagset_size
    TP = ((T + 127) // 128) * 128                             # lane-dense head

    wih_f, whh_f, bih_f, bhh_f, wih_b, whh_b, bih_b, bhh_b = params["gru"]

    def gate(w, k):                       # slab k of a torch-layout [3Hd, *] W
        return w[k * Hd:(k + 1) * Hd]

    # Block-diagonal input-projection weight: rows 0:H consume x_t (fwd gates),
    # rows H:2H consume x_(S-1-t) (bwd gates). Gate layout fr|br|fz|bz|fn|bn.
    wih_blk = jnp.zeros((2 * H, G), jnp.float32)
    wih_blk = wih_blk.at[0:H, 0 * Hd:1 * Hd].set(gate(wih_f, 0).T)      # fr
    wih_blk = wih_blk.at[H:2 * H, 1 * Hd:2 * Hd].set(gate(wih_b, 0).T)  # br
    wih_blk = wih_blk.at[0:H, 2 * Hd:3 * Hd].set(gate(wih_f, 1).T)      # fz
    wih_blk = wih_blk.at[H:2 * H, 3 * Hd:4 * Hd].set(gate(wih_b, 1).T)  # bz
    wih_blk = wih_blk.at[0:H, 4 * Hd:5 * Hd].set(gate(wih_f, 2).T)      # fn
    wih_blk = wih_blk.at[H:2 * H, 5 * Hd:6 * Hd].set(gate(wih_b, 2).T)  # bn

    # Block-diagonal recurrent weight: rows 0:Hd consume hf, rows Hd:2Hd hb.
    whh_blk = jnp.zeros((2 * Hd, G), jnp.float32)
    whh_blk = whh_blk.at[0:Hd, 0 * Hd:1 * Hd].set(gate(whh_f, 0).T)
    whh_blk = whh_blk.at[Hd:2 * Hd, 1 * Hd:2 * Hd].set(gate(whh_b, 0).T)
    whh_blk = whh_blk.at[0:Hd, 2 * Hd:3 * Hd].set(gate(whh_f, 1).T)
    whh_blk = whh_blk.at[Hd:2 * Hd, 3 * Hd:4 * Hd].set(gate(whh_b, 1).T)
    whh_blk = whh_blk.at[0:Hd, 4 * Hd:5 * Hd].set(gate(whh_f, 2).T)
    whh_blk = whh_blk.at[Hd:2 * Hd, 5 * Hd:6 * Hd].set(gate(whh_b, 2).T)

    w_pack = jnp.concatenate([wih_blk, whh_blk], axis=0)      # [2H+2Hd, 6Hd]

    # Folded gate biases (b_hh of r,z folded in; n-gate b_hh kept separate).
    bi = jnp.concatenate([
        bih_f[0:Hd] + bhh_f[0:Hd],                   # fr
        bih_b[0:Hd] + bhh_b[0:Hd],                   # br
        bih_f[Hd:2 * Hd] + bhh_f[Hd:2 * Hd],         # fz
        bih_b[Hd:2 * Hd] + bhh_b[Hd:2 * Hd],         # bz
        bih_f[2 * Hd:3 * Hd],                        # fn
        bih_b[2 * Hd:3 * Hd],                        # bn
    ])
    bhhn = jnp.concatenate([bhh_f[2 * Hd:3 * Hd], bhh_b[2 * Hd:3 * Hd]])
    bias_row = jnp.concatenate([bi, bhhn]).reshape(1, 8 * Hd)

    # Head weight + bias packed; padded lanes get a finite -1e30 bias so
    # softmax / argmax / smoothing are unaffected (do NOT use -inf).
    woutT = jnp.zeros((H, TP), jnp.float32).at[:, :T].set(params["w_out"].T)
    bout = jnp.full((1, TP), -1e30, jnp.float32).at[0, :T].set(params["b_out"])
    wout_pack = jnp.concatenate([woutT, bout], axis=0)        # [2Hd+1, TP]

    # Time-major rows (t,b); fwd half sees x_t, bwd half sees x_(S-1-t).
    x_tm = jnp.transpose(emb, (1, 0, 2)).astype(jnp.float32)  # [S, B, H]
    xcat = jnp.concatenate([x_tm, x_tm[::-1]], axis=-1).reshape(N, 2 * H)

    label_sb = jnp.transpose(label).reshape(N, 1).astype(jnp.int32)

    vmem = pl.BlockSpec(memory_space=pltpu.MemorySpace.VMEM)
    args = (xcat, w_pack, bias_row, wout_pack, label_sb)

    stats, predict_sb = pl.pallas_call(
        functools.partial(fused_gru_head_kernel, S=S, B=B, T=T, eps=eps),
        out_shape=(jax.ShapeDtypeStruct((1, 2), jnp.float32),
                   jax.ShapeDtypeStruct((N, 1), jnp.int32)),
        in_specs=[vmem] * len(args),
        out_specs=(vmem, vmem),
    )(*args)

    loss = stats[0, 0]
    correct = stats[0, 1]
    # Kernel rows are (t, b); re-order predictions to torch's (b, s) flattening.
    predict = predict_sb.reshape(S, B).T.reshape(-1)
    return loss, correct, predict, label.reshape(-1)


# -----------------------------------------------------------------------------
# Pure-JAX reference for validation.
# -----------------------------------------------------------------------------
def gru_ref_dir(x, wih, whh, bih, bhh, reverse):
    S, B, _ = x.shape
    Hd = whh.shape[1]
    h = jnp.zeros((B, Hd), jnp.float32)
    out = [None] * S
    order = range(S - 1, -1, -1) if reverse else range(S)
    for t in order:
        gi = x[t] @ wih.T + bih
        gh = h @ whh.T + bhh
        r = jax.nn.sigmoid(gi[:, :Hd] + gh[:, :Hd])
        z = jax.nn.sigmoid(gi[:, Hd:2 * Hd] + gh[:, Hd:2 * Hd])
        n = jnp.tanh(gi[:, 2 * Hd:] + r * gh[:, 2 * Hd:])
        h = (1 - z) * n + z * h
        out[t] = h
    return jnp.stack(out, 0)


def reference_forward(src, label, params, tagset_size, eps=0.1):
    B, S = src.shape
    emb = embed(src, params)
    x = jnp.transpose(emb, (1, 0, 2))
    wih_f, whh_f, bih_f, bhh_f, wih_b, whh_b, bih_b, bhh_b = params["gru"]
    of = gru_ref_dir(x, wih_f, whh_f, bih_f, bhh_f, reverse=False)
    ob = gru_ref_dir(x, wih_b, whh_b, bih_b, bhh_b, reverse=True)
    out = jnp.concatenate([of, ob], axis=-1)
    out = jnp.transpose(out, (1, 0, 2)).reshape(B * S, -1)
    logits = out @ params["w_out"].T + params["b_out"]
    logp = jax.nn.log_softmax(logits, axis=-1)
    label_flat = label.reshape(-1)
    one_hot = jax.nn.one_hot(label_flat, tagset_size, dtype=jnp.float32)
    smooth = (1 - eps) * one_hot + eps / tagset_size
    per_tok = -jnp.sum(logp * smooth, axis=1)
    mask = (label_flat > 0).astype(jnp.float32)
    loss = jnp.sum(mask * per_tok)
    predict = jnp.argmax(logp, axis=-1)
    correct = jnp.sum(mask * (predict == label_flat).astype(jnp.float32))
    return loss, correct, predict, label_flat


# -----------------------------------------------------------------------------
if __name__ == "__main__":
    B, S, H, VOCAB, TAGS = 2, 8, 32, 50, 9
    Hd = H // 2

    key = jax.random.PRNGKey(0)
    ks = jax.random.split(key, 12)

    params = {
        "word_emb": 0.1 * jax.random.normal(ks[0], (VOCAB, H), jnp.float32),
        "pos_emb": 0.1 * jax.random.normal(ks[1], (S, H), jnp.float32),
        "ln_gamma": jnp.ones((H,), jnp.float32),
        "ln_beta": jnp.zeros((H,), jnp.float32),
        "gru": (
            0.2 * jax.random.normal(ks[2], (3 * Hd, H), jnp.float32),   # W_ih fwd
            0.2 * jax.random.normal(ks[3], (3 * Hd, Hd), jnp.float32),  # W_hh fwd
            0.05 * jax.random.normal(ks[4], (3 * Hd,), jnp.float32),    # b_ih fwd
            0.05 * jax.random.normal(ks[5], (3 * Hd,), jnp.float32),    # b_hh fwd
            0.2 * jax.random.normal(ks[6], (3 * Hd, H), jnp.float32),   # W_ih bwd
            0.2 * jax.random.normal(ks[7], (3 * Hd, Hd), jnp.float32),  # W_hh bwd
            0.05 * jax.random.normal(ks[8], (3 * Hd,), jnp.float32),    # b_ih bwd
            0.05 * jax.random.normal(ks[9], (3 * Hd,), jnp.float32),    # b_hh bwd
        ),
        "w_out": 0.2 * jax.random.normal(ks[10], (TAGS, H), jnp.float32),
        "b_out": jnp.zeros((TAGS,), jnp.float32),
    }

    src = jax.random.randint(jax.random.PRNGKey(1), (B, S), 1, VOCAB, jnp.int32)
    label = jax.random.randint(jax.random.PRNGKey(2), (B, S), 0, TAGS, jnp.int32)

    loss, correct, predict, lab = only_gru_forward(src, label, params, TAGS)
    jax.block_until_ready((loss, correct, predict, lab))

    loss_r, correct_r, predict_r, lab_r = reference_forward(src, label, params, TAGS)

    assert jnp.allclose(loss, loss_r, rtol=1e-3, atol=1e-3), (loss, loss_r)
    assert jnp.allclose(correct, correct_r), (correct, correct_r)
    assert jnp.all(predict == predict_r)
    assert jnp.all(lab == lab_r)

    print("KERNEL_OK")
</pallas_src>

<mosaic_0001>
module attributes {stable_mosaic.version = 11 : i64} {
  func.func @fused_gru_head_kernel(%arg0: memref<16x64xf32, #tpu.memory_space<vmem>>, %arg1: memref<96x96xf32, #tpu.memory_space<vmem>>, %arg2: memref<1x128xf32, #tpu.memory_space<vmem>>, %arg3: memref<33x128xf32, #tpu.memory_space<vmem>>, %arg4: memref<16x1xi32, #tpu.memory_space<vmem>>, %arg5: memref<1x2xf32, #tpu.memory_space<vmem>>, %arg6: memref<16x1xi32, #tpu.memory_space<vmem>>) attributes {dimension_semantics = [], scalar_prefetch = 0 : i64, scratch_operands = 0 : i64, tpu.core_type = #tpu.core_type<tc>} {
    %c0 = arith.constant 0 : index
    %c0_0 = arith.constant 0 : index
    %0 = vector.load %arg1[%c0, %c0_0] : memref<96x96xf32, #tpu.memory_space<vmem>>, vector<64x96xf32>
    %c64 = arith.constant 64 : index
    %c0_1 = arith.constant 0 : index
    %1 = vector.load %arg1[%c64, %c0_1] : memref<96x96xf32, #tpu.memory_space<vmem>>, vector<32x96xf32>
    %c0_2 = arith.constant 0 : index
    %c0_3 = arith.constant 0 : index
    %2 = vector.load %arg2[%c0_2, %c0_3] : memref<1x128xf32, #tpu.memory_space<vmem>>, vector<1x96xf32>
    %c0_4 = arith.constant 0 : index
    %c96 = arith.constant 96 : index
    %3 = vector.load %arg2[%c0_4, %c96] : memref<1x128xf32, #tpu.memory_space<vmem>>, vector<1x32xf32>
    %4 = vector.shape_cast %3 : vector<1x32xf32> to vector<1x32xf32>
    %5 = vector.broadcast %4 : vector<1x32xf32> to vector<2x32xf32>
    %c0_5 = arith.constant 0 : index
    %c0_6 = arith.constant 0 : index
    %6 = vector.load %arg0[%c0_5, %c0_6] : memref<16x64xf32, #tpu.memory_space<vmem>>, vector<16x64xf32>
    %cst = arith.constant dense<0.000000e+00> : vector<16x96xf32>
    %7 = tpu.matmul %6, %0, %cst {dimension_numbers = #tpu.dot_dimension_numbers<[1], [0], [0], [1], [0, 0, 1, 1], [], []>} : vector<16x64xf32>, vector<64x96xf32>, vector<16x96xf32> -> vector<16x96xf32>
    %8 = vector.broadcast %2 : vector<1x96xf32> to vector<16x96xf32>
    %9 = arith.addf %7, %8 : vector<16x96xf32>
    %cst_7 = arith.constant 0.000000e+00 : f32
    %10 = vector.broadcast %cst_7 : f32 to vector<2x32xf32>
    %11 = vector.extract_strided_slice %9 {offsets = [0, 0], sizes = [2, 96], strides = [1, 1]} : vector<16x96xf32> to vector<2x96xf32>
    %cst_8 = arith.constant dense<0.000000e+00> : vector<2x96xf32>
    %12 = tpu.matmul %10, %1, %cst_8 {dimension_numbers = #tpu.dot_dimension_numbers<[1], [0], [0], [1], [0, 0, 1, 1], [], []>} : vector<2x32xf32>, vector<32x96xf32>, vector<2x96xf32> -> vector<2x96xf32>
    %13 = vector.extract_strided_slice %11 {offsets = [0, 0], sizes = [2, 64], strides = [1, 1]} : vector<2x96xf32> to vector<2x64xf32>
    %14 = vector.extract_strided_slice %12 {offsets = [0, 0], sizes = [2, 64], strides = [1, 1]} : vector<2x96xf32> to vector<2x64xf32>
    %15 = arith.addf %13, %14 : vector<2x64xf32>
    %16 = arith.negf %15 : vector<2x64xf32>
    %17 = math.exp %16 : vector<2x64xf32>
    %cst_9 = arith.constant 1.000000e+00 : f32
    %18 = vector.broadcast %cst_9 : f32 to vector<2x64xf32>
    %19 = arith.addf %18, %17 : vector<2x64xf32>
    %20 = arith.divf %18, %19 : vector<2x64xf32>
    %21 = vector.extract_strided_slice %20 {offsets = [0, 0], sizes = [2, 32], strides = [1, 1]} : vector<2x64xf32> to vector<2x32xf32>
    %22 = vector.extract_strided_slice %20 {offsets = [0, 32], sizes = [2, 32], strides = [1, 1]} : vector<2x64xf32> to vector<2x32xf32>
    %23 = vector.extract_strided_slice %11 {offsets = [0, 64], sizes = [2, 32], strides = [1, 1]} : vector<2x96xf32> to vector<2x32xf32>
    %24 = vector.extract_strided_slice %12 {offsets = [0, 64], sizes = [2, 32], strides = [1, 1]} : vector<2x96xf32> to vector<2x32xf32>
    %25 = arith.addf %24, %5 : vector<2x32xf32>
    %26 = arith.mulf %21, %25 : vector<2x32xf32>
    %27 = arith.addf %23, %26 : vector<2x32xf32>
    %28 = math.tanh %27 : vector<2x32xf32>
    %cst_10 = arith.constant 1.000000e+00 : f32
    %29 = vector.broadcast %cst_10 : f32 to vector<2x32xf32>
    %30 = arith.subf %29, %22 : vector<2x32xf32>
    %31 = arith.mulf %30, %28 : vector<2x32xf32>
    %32 = arith.mulf %22, %10 : vector<2x32xf32>
    %33 = arith.addf %31, %32 : vector<2x32xf32>
    %34 = vector.extract_strided_slice %9 {offsets = [2, 0], sizes = [2, 96], strides = [1, 1]} : vector<16x96xf32> to vector<2x96xf32>
    %cst_11 = arith.constant dense<0.000000e+00> : vector<2x96xf32>
    %35 = tpu.matmul %33, %1, %cst_11 {dimension_numbers = #tpu.dot_dimension_numbers<[1], [0], [0], [1], [0, 0, 1, 1], [], []>} : vector<2x32xf32>, vector<32x96xf32>, vector<2x96xf32> -> vector<2x96xf32>
    %36 = vector.extract_strided_slice %34 {offsets = [0, 0], sizes = [2, 64], strides = [1, 1]} : vector<2x96xf32> to vector<2x64xf32>
    %37 = vector.extract_strided_slice %35 {offsets = [0, 0], sizes = [2, 64], strides = [1, 1]} : vector<2x96xf32> to vector<2x64xf32>
    %38 = arith.addf %36, %37 : vector<2x64xf32>
    %39 = arith.negf %38 : vector<2x64xf32>
    %40 = math.exp %39 : vector<2x64xf32>
    %cst_12 = arith.constant 1.000000e+00 : f32
    %41 = vector.broadcast %cst_12 : f32 to vector<2x64xf32>
    %42 = arith.addf %41, %40 : vector<2x64xf32>
    %43 = arith.divf %41, %42 : vector<2x64xf32>
    %44 = vector.extract_strided_slice %43 {offsets = [0, 0], sizes = [2, 32], strides = [1, 1]} : vector<2x64xf32> to vector<2x32xf32>
    %45 = vector.extract_strided_slice %43 {offsets = [0, 32], sizes = [2, 32], strides = [1, 1]} : vector<2x64xf32> to vector<2x32xf32>
    %46 = vector.extract_strided_slice %34 {offsets = [0, 64], sizes = [2, 32], strides = [1, 1]} : vector<2x96xf32> to vector<2x32xf32>
    %47 = vector.extract_strided_slice %35 {offsets = [0, 64], sizes = [2, 32], strides = [1, 1]} : vector<2x96xf32> to vector<2x32xf32>
    %48 = arith.addf %47, %5 : vector<2x32xf32>
    %49 = arith.mulf %44, %48 : vector<2x32xf32>
    %50 = arith.addf %46, %49 : vector<2x32xf32>
    %51 = math.tanh %50 : vector<2x32xf32>
    %cst_13 = arith.constant 1.000000e+00 : f32
    %52 = vector.broadcast %cst_13 : f32 to vector<2x32xf32>
    %53 = arith.subf %52, %45 : vector<2x32xf32>
    %54 = arith.mulf %53, %51 : vector<2x32xf32>
    %55 = arith.mulf %45, %33 : vector<2x32xf32>
    %56 = arith.addf %54, %55 : vector<2x32xf32>
    %57 = vector.extract_strided_slice %9 {offsets = [4, 0], sizes = [2, 96], strides = [1, 1]} : vector<16x96xf32> to vector<2x96xf32>
    %cst_14 = arith.constant dense<0.000000e+00> : vector<2x96xf32>
    %58 = tpu.matmul %56, %1, %cst_14 {dimension_numbers = #tpu.dot_dimension_numbers<[1], [0], [0], [1], [0, 0, 1, 1], [], []>} : vector<2x32xf32>, vector<32x96xf32>, vector<2x96xf32> -> vector<2x96xf32>
    %59 = vector.extract_strided_slice %57 {offsets = [0, 0], sizes = [2, 64], strides = [1, 1]} : vector<2x96xf32> to vector<2x64xf32>
    %60 = vector.extract_strided_slice %58 {offsets = [0, 0], sizes = [2, 64], strides = [1, 1]} : vector<2x96xf32> to vector<2x64xf32>
    %61 = arith.addf %59, %60 : vector<2x64xf32>
    %62 = arith.negf %61 : vector<2x64xf32>
    %63 = math.exp %62 : vector<2x64xf32>
    %cst_15 = arith.constant 1.000000e+00 : f32
    %64 = vector.broadcast %cst_15 : f32 to vector<2x64xf32>
    %65 = arith.addf %64, %63 : vector<2x64xf32>
    %66 = arith.divf %64, %65 : vector<2x64xf32>
    %67 = vector.extract_strided_slice %66 {offsets = [0, 0], sizes = [2, 32], strides = [1, 1]} : vector<2x64xf32> to vector<2x32xf32>
    %68 = vector.extract_strided_slice %66 {offsets = [0, 32], sizes = [2, 32], strides = [1, 1]} : vector<2x64xf32> to vector<2x32xf32>
    %69 = vector.extract_strided_slice %57 {offsets = [0, 64], sizes = [2, 32], strides = [1, 1]} : vector<2x96xf32> to vector<2x32xf32>
    %70 = vector.extract_strided_slice %58 {offsets = [0, 64], sizes = [2, 32], strides = [1, 1]} : vector<2x96xf32> to vector<2x32xf32>
    %71 = arith.addf %70, %5 : vector<2x32xf32>
    %72 = arith.mulf %67, %71 : vector<2x32xf32>
    %73 = arith.addf %69, %72 : vector<2x32xf32>
    %74 = math.tanh %73 : vector<2x32xf32>
    %cst_16 = arith.constant 1.000000e+00 : f32
    %75 = vector.broadcast %cst_16 : f32 to vector<2x32xf32>
    %76 = arith.subf %75, %68 : vector<2x32xf32>
    %77 = arith.mulf %76, %74 : vector<2x32xf32>
    %78 = arith.mulf %68, %56 : vector<2x32xf32>
    %79 = arith.addf %77, %78 : vector<2x32xf32>
    %80 = vector.extract_strided_slice %9 {offsets = [6, 0], sizes = [2, 96], strides = [1, 1]} : vector<16x96xf32> to vector<2x96xf32>
    %cst_17 = arith.constant dense<0.000000e+00> : vector<2x96xf32>
    %81 = tpu.matmul %79, %1, %cst_17 {dimension_numbers = #tpu.dot_dimension_numbers<[1], [0], [0], [1], [0, 0, 1, 1], [], []>} : vector<2x32xf32>, vector<32x96xf32>, vector<2x96xf32> -> vector<2x96xf32>
    %82 = vector.extract_strided_slice %80 {offsets = [0, 0], sizes = [2, 64], strides = [1, 1]} : vector<2x96xf32> to vector<2x64xf32>
    %83 = vector.extract_strided_slice %81 {offsets = [0, 0], sizes = [2, 64], strides = [1, 1]} : vector<2x96xf32> to vector<2x64xf32>
    %84 = arith.addf %82, %83 : vector<2x64xf32>
    %85 = arith.negf %84 : vector<2x64xf32>
    %86 = math.exp %85 : vector<2x64xf32>
    %cst_18 = arith.constant 1.000000e+00 : f32
    %87 = vector.broadcast %cst_18 : f32 to vector<2x64xf32>
    %88 = arith.addf %87, %86 : vector<2x64xf32>
    %89 = arith.divf %87, %88 : vector<2x64xf32>
    %90 = vector.extract_strided_slice %89 {offsets = [0, 0], sizes = [2, 32], strides = [1, 1]} : vector<2x64xf32> to vector<2x32xf32>
    %91 = vector.extract_strided_slice %89 {offsets = [0, 32], sizes = [2, 32], strides = [1, 1]} : vector<2x64xf32> to vector<2x32xf32>
    %92 = vector.extract_strided_slice %80 {offsets = [0, 64], sizes = [2, 32], strides = [1, 1]} : vector<2x96xf32> to vector<2x32xf32>
    %93 = vector.extract_strided_slice %81 {offsets = [0, 64], sizes = [2, 32], strides = [1, 1]} : vector<2x96xf32> to vector<2x32xf32>
    %94 = arith.addf %93, %5 : vector<2x32xf32>
    %95 = arith.mulf %90, %94 : vector<2x32xf32>
    %96 = arith.addf %92, %95 : vector<2x32xf32>
    %97 = math.tanh %96 : vector<2x32xf32>
    %cst_19 = arith.constant 1.000000e+00 : f32
    %98 = vector.broadcast %cst_19 : f32 to vector<2x32xf32>
    %99 = arith.subf %98, %91 : vector<2x32xf32>
    %100 = arith.mulf %99, %97 : vector<2x32xf32>
    %101 = arith.mulf %91, %79 : vector<2x32xf32>
    %102 = arith.addf %100, %101 : vector<2x32xf32>
    %103 = vector.extract_strided_slice %9 {offsets = [8, 0], sizes = [2, 96], strides = [1, 1]} : vector<16x96xf32> to vector<2x96xf32>
    %cst_20 = arith.constant dense<0.000000e+00> : vector<2x96xf32>
    %104 = tpu.matmul %102, %1, %cst_20 {dimension_numbers = #tpu.dot_dimension_numbers<[1], [0], [0], [1], [0, 0, 1, 1], [], []>} : vector<2x32xf32>, vector<32x96xf32>, vector<2x96xf32> -> vector<2x96xf32>
    %105 = vector.extract_strided_slice %103 {offsets = [0, 0], sizes = [2, 64], strides = [1, 1]} : vector<2x96xf32> to vector<2x64xf32>
    %106 = vector.extract_strided_slice %104 {offsets = [0, 0], sizes = [2, 64], strides = [1, 1]} : vector<2x96xf32> to vector<2x64xf32>
    %107 = arith.addf %105, %106 : vector<2x64xf32>
    %108 = arith.negf %107 : vector<2x64xf32>
    %109 = math.exp %108 : vector<2x64xf32>
    %cst_21 = arith.constant 1.000000e+00 : f32
    %110 = vector.broadcast %cst_21 : f32 to vector<2x64xf32>
    %111 = arith.addf %110, %109 : vector<2x64xf32>
    %112 = arith.divf %110, %111 : vector<2x64xf32>
    %113 = vector.extract_strided_slice %112 {offsets = [0, 0], sizes = [2, 32], strides = [1, 1]} : vector<2x64xf32> to vector<2x32xf32>
    %114 = vector.extract_strided_slice %112 {offsets = [0, 32], sizes = [2, 32], strides = [1, 1]} : vector<2x64xf32> to vector<2x32xf32>
    %115 = vector.extract_strided_slice %103 {offsets = [0, 64], sizes = [2, 32], strides = [1, 1]} : vector<2x96xf32> to vector<2x32xf32>
    %116 = vector.extract_strided_slice %104 {offsets = [0, 64], sizes = [2, 32], strides = [1, 1]} : vector<2x96xf32> to vector<2x32xf32>
    %117 = arith.addf %116, %5 : vector<2x32xf32>
    %118 = arith.mulf %113, %117 : vector<2x32xf32>
    %119 = arith.addf %115, %118 : vector<2x32xf32>
    %120 = math.tanh %119 : vector<2x32xf32>
    %cst_22 = arith.constant 1.000000e+00 : f32
    %121 = vector.broadcast %cst_22 : f32 to vector<2x32xf32>
    %122 = arith.subf %121, %114 : vector<2x32xf32>
    %123 = arith.mulf %122, %120 : vector<2x32xf32>
    %124 = arith.mulf %114, %102 : vector<2x32xf32>
    %125 = arith.addf %123, %124 : vector<2x32xf32>
    %126 = vector.extract_strided_slice %9 {offsets = [10, 0], sizes = [2, 96], strides = [1, 1]} : vector<16x96xf32> to vector<2x96xf32>
    %cst_23 = arith.constant dense<0.000000e+00> : vector<2x96xf32>
    %127 = tpu.matmul %125, %1, %cst_23 {dimension_numbers = #tpu.dot_dimension_numbers<[1], [0], [0], [1], [0, 0, 1, 1], [], []>} : vector<2x32xf32>, vector<32x96xf32>, vector<2x96xf32> -> vector<2x96xf32>
    %128 = vector.extract_strided_slice %126 {offsets = [0, 0], sizes = [2, 64], strides = [1, 1]} : vector<2x96xf32> to vector<2x64xf32>
    %129 = vector.extract_strided_slice %127 {offsets = [0, 0], sizes = [2, 64], strides = [1, 1]} : vector<2x96xf32> to vector<2x64xf32>
    %130 = arith.addf %128, %129 : vector<2x64xf32>
    %131 = arith.negf %130 : vector<2x64xf32>
    %132 = math.exp %131 : vector<2x64xf32>
    %cst_24 = arith.constant 1.000000e+00 : f32
    %133 = vector.broadcast %cst_24 : f32 to vector<2x64xf32>
    %134 = arith.addf %133, %132 : vector<2x64xf32>
    %135 = arith.divf %133, %134 : vector<2x64xf32>
    %136 = vector.extract_strided_slice %135 {offsets = [0, 0], sizes = [2, 32], strides = [1, 1]} : vector<2x64xf32> to vector<2x32xf32>
    %137 = vector.extract_strided_slice %135 {offsets = [0, 32], sizes = [2, 32], strides = [1, 1]} : vector<2x64xf32> to vector<2x32xf32>
    %138 = vector.extract_strided_slice %126 {offsets = [0, 64], sizes = [2, 32], strides = [1, 1]} : vector<2x96xf32> to vector<2x32xf32>
    %139 = vector.extract_strided_slice %127 {offsets = [0, 64], sizes = [2, 32], strides = [1, 1]} : vector<2x96xf32> to vector<2x32xf32>
    %140 = arith.addf %139, %5 : vector<2x32xf32>
    %141 = arith.mulf %136, %140 : vector<2x32xf32>
    %142 = arith.addf %138, %141 : vector<2x32xf32>
    %143 = math.tanh %142 : vector<2x32xf32>
    %cst_25 = arith.constant 1.000000e+00 : f32
    %144 = vector.broadcast %cst_25 : f32 to vector<2x32xf32>
    %145 = arith.subf %144, %137 : vector<2x32xf32>
    %146 = arith.mulf %145, %143 : vector<2x32xf32>
    %147 = arith.mulf %137, %125 : vector<2x32xf32>
    %148 = arith.addf %146, %147 : vector<2x32xf32>
    %149 = vector.extract_strided_slice %9 {offsets = [12, 0], sizes = [2, 96], strides = [1, 1]} : vector<16x96xf32> to vector<2x96xf32>
    %cst_26 = arith.constant dense<0.000000e+00> : vector<2x96xf32>
    %150 = tpu.matmul %148, %1, %cst_26 {dimension_numbers = #tpu.dot_dimension_numbers<[1], [0], [0], [1], [0, 0, 1, 1], [], []>} : vector<2x32xf32>, vector<32x96xf32>, vector<2x96xf32> -> vector<2x96xf32>
    %151 = vector.extract_strided_slice %149 {offsets = [0, 0], sizes = [2, 64], strides = [1, 1]} : vector<2x96xf32> to vector<2x64xf32>
    %152 = vector.extract_strided_slice %150 {offsets = [0, 0], sizes = [2, 64], strides = [1, 1]} : vector<2x96xf32> to vector<2x64xf32>
    %153 = arith.addf %151, %152 : vector<2x64xf32>
    %154 = arith.negf %153 : vector<2x64xf32>
    %155 = math.exp %154 : vector<2x64xf32>
    %cst_27 = arith.constant 1.000000e+00 : f32
    %156 = vector.broadcast %cst_27 : f32 to vector<2x64xf32>
    %157 = arith.addf %156, %155 : vector<2x64xf32>
    %158 = arith.divf %156, %157 : vector<2x64xf32>
    %159 = vector.extract_strided_slice %158 {offsets = [0, 0], sizes = [2, 32], strides = [1, 1]} : vector<2x64xf32> to vector<2x32xf32>
    %160 = vector.extract_strided_slice %158 {offsets = [0, 32], sizes = [2, 32], strides = [1, 1]} : vector<2x64xf32> to vector<2x32xf32>
    %161 = vector.extract_strided_slice %149 {offsets = [0, 64], sizes = [2, 32], strides = [1, 1]} : vector<2x96xf32> to vector<2x32xf32>
    %162 = vector.extract_strided_slice %150 {offsets = [0, 64], sizes = [2, 32], strides = [1, 1]} : vector<2x96xf32> to vector<2x32xf32>
    %163 = arith.addf %162, %5 : vector<2x32xf32>
    %164 = arith.mulf %159, %163 : vector<2x32xf32>
    %165 = arith.addf %161, %164 : vector<2x32xf32>
    %166 = math.tanh %165 : vector<2x32xf32>
    %cst_28 = arith.constant 1.000000e+00 : f32
    %167 = vector.broadcast %cst_28 : f32 to vector<2x32xf32>
    %168 = arith.subf %167, %160 : vector<2x32xf32>
    %169 = arith.mulf %168, %166 : vector<2x32xf32>
    %170 = arith.mulf %160, %148 : vector<2x32xf32>
    %171 = arith.addf %169, %170 : vector<2x32xf32>
    %172 = vector.extract_strided_slice %9 {offsets = [14, 0], sizes = [2, 96], strides = [1, 1]} : vector<16x96xf32> to vector<2x96xf32>
    %cst_29 = arith.constant dense<0.000000e+00> : vector<2x96xf32>
    %173 = tpu.matmul %171, %1, %cst_29 {dimension_numbers = #tpu.dot_dimension_numbers<[1], [0], [0], [1], [0, 0, 1, 1], [], []>} : vector<2x32xf32>, vector<32x96xf32>, vector<2x96xf32> -> vector<2x96xf32>
    %174 = vector.extract_strided_slice %172 {offsets = [0, 0], sizes = [2, 64], strides = [1, 1]} : vector<2x96xf32> to vector<2x64xf32>
    %175 = vector.extract_strided_slice %173 {offsets = [0, 0], sizes = [2, 64], strides = [1, 1]} : vector<2x96xf32> to vector<2x64xf32>
    %176 = arith.addf %174, %175 : vector<2x64xf32>
    %177 = arith.negf %176 : vector<2x64xf32>
    %178 = math.exp %177 : vector<2x64xf32>
    %cst_30 = arith.constant 1.000000e+00 : f32
    %179 = vector.broadcast %cst_30 : f32 to vector<2x64xf32>
    %180 = arith.addf %179, %178 : vector<2x64xf32>
    %181 = arith.divf %179, %180 : vector<2x64xf32>
    %182 = vector.extract_strided_slice %181 {offsets = [0, 0], sizes = [2, 32], strides = [1, 1]} : vector<2x64xf32> to vector<2x32xf32>
    %183 = vector.extract_strided_slice %181 {offsets = [0, 32], sizes = [2, 32], strides = [1, 1]} : vector<2x64xf32> to vector<2x32xf32>
    %184 = vector.extract_strided_slice %172 {offsets = [0, 64], sizes = [2, 32], strides = [1, 1]} : vector<2x96xf32> to vector<2x32xf32>
    %185 = vector.extract_strided_slice %173 {offsets = [0, 64], sizes = [2, 32], strides = [1, 1]} : vector<2x96xf32> to vector<2x32xf32>
    %186 = arith.addf %185, %5 : vector<2x32xf32>
    %187 = arith.mulf %182, %186 : vector<2x32xf32>
    %188 = arith.addf %184, %187 : vector<2x32xf32>
    %189 = math.tanh %188 : vector<2x32xf32>
    %cst_31 = arith.constant 1.000000e+00 : f32
    %190 = vector.broadcast %cst_31 : f32 to vector<2x32xf32>
    %191 = arith.subf %190, %183 : vector<2x32xf32>
    %192 = arith.mulf %191, %189 : vector<2x32xf32>
    %193 = arith.mulf %183, %171 : vector<2x32xf32>
    %194 = arith.addf %192, %193 : vector<2x32xf32>
    %195 = tpu.iota {dimensions = array<i32: 1>} : vector<2x32xi32>
    %c16_i32 = arith.constant 16 : i32
    %196 = vector.broadcast %c16_i32 : i32 to vector<2x32xi32>
    %197 = arith.cmpi slt, %195, %196 : vector<2x32xi32>
    %198 = arith.select %197, %33, %194 : vector<2x32xi1>, vector<2x32xf32>
    %199 = arith.select %197, %56, %171 : vector<2x32xi1>, vector<2x32xf32>
    %200 = arith.select %197, %79, %148 : vector<2x32xi1>, vector<2x32xf32>
    %201 = arith.select %197, %102, %125 : vector<2x32xi1>, vector<2x32xf32>
    %202 = arith.select %197, %125, %102 : vector<2x32xi1>, vector<2x32xf32>
    %203 = arith.select %197, %148, %79 : vector<2x32xi1>, vector<2x32xf32>
    %204 = arith.select %197, %171, %56 : vector<2x32xi1>, vector<2x32xf32>
    %205 = arith.select %197, %194, %33 : vector<2x32xi1>, vector<2x32xf32>
    %206 = tpu.concatenate %198, %199, %200, %201, %202, %203, %204, %205 in 0 : vector<2x32xf32>, vector<2x32xf32>, vector<2x32xf32>, vector<2x32xf32>, vector<2x32xf32>, vector<2x32xf32>, vector<2x32xf32>, vector<2x32xf32> -> vector<16x32xf32>
    %c0_32 = arith.constant 0 : index
    %c0_33 = arith.constant 0 : index
    %207 = vector.load %arg3[%c0_32, %c0_33] : memref<33x128xf32, #tpu.memory_space<vmem>>, vector<32x128xf32>
    %c32 = arith.constant 32 : index
    %c0_34 = arith.constant 0 : index
    %208 = vector.load %arg3[%c32, %c0_34] : memref<33x128xf32, #tpu.memory_space<vmem>>, vector<1x128xf32>
    %cst_35 = arith.constant dense<0.000000e+00> : vector<16x128xf32>
    %209 = tpu.matmul %206, %207, %cst_35 {dimension_numbers = #tpu.dot_dimension_numbers<[1], [0], [0], [1], [0, 0, 1, 1], [], []>} : vector<16x32xf32>, vector<32x128xf32>, vector<16x128xf32> -> vector<16x128xf32>
    %210 = vector.broadcast %208 : vector<1x128xf32> to vector<16x128xf32>
    %211 = arith.addf %209, %210 : vector<16x128xf32>
    %cst_36 = arith.constant dense<0xFF800000> : vector<16xf32>
    %212 = vector.multi_reduction <maximumf>, %211, %cst_36 [1] : vector<16x128xf32> to vector<16xf32>
    %213 = vector.shape_cast %212 : vector<16xf32> to vector<16x1xf32>
    %214 = vector.broadcast %213 : vector<16x1xf32> to vector<16x128xf32>
    %215 = arith.subf %211, %214 : vector<16x128xf32>
    %216 = math.exp %215 : vector<16x128xf32>
    %cst_37 = arith.constant dense<0.000000e+00> : vector<16xf32>
    %217 = vector.multi_reduction <add>, %216, %cst_37 [1] : vector<16x128xf32> to vector<16xf32>
    %218 = vector.shape_cast %217 : vector<16xf32> to vector<16x1xf32>
    %219 = math.log %218 : vector<16x1xf32>
    %220 = arith.addf %213, %219 : vector<16x1xf32>
    %221 = vector.broadcast %220 : vector<16x1xf32> to vector<16x128xf32>
    %222 = arith.subf %211, %221 : vector<16x128xf32>
    %c0_38 = arith.constant 0 : index
    %c0_39 = arith.constant 0 : index
    %223 = vector.load %arg4[%c0_38, %c0_39] : memref<16x1xi32, #tpu.memory_space<vmem>>, vector<16x1xi32>
    %224 = tpu.iota {dimensions = array<i32: 1>} : vector<16x128xi32>
    %225 = vector.broadcast %223 : vector<16x1xi32> to vector<16x128xi32>
    %226 = arith.cmpi eq, %224, %225 : vector<16x128xi32>
    %227 = arith.extui %226 : vector<16x128xi1> to vector<16x128xi32>
    %228 = arith.sitofp %227 : vector<16x128xi32> to vector<16x128xf32>
    %c9_i32 = arith.constant 9 : i32
    %229 = vector.broadcast %c9_i32 : i32 to vector<16x128xi32>
    %230 = arith.cmpi slt, %224, %229 : vector<16x128xi32>
    %231 = arith.extui %230 : vector<16x128xi1> to vector<16x128xi32>
    %232 = arith.sitofp %231 : vector<16x128xi32> to vector<16x128xf32>
    %cst_40 = arith.constant 0.899999976 : f32
    %233 = vector.broadcast %cst_40 : f32 to vector<16x128xf32>
    %234 = arith.mulf %233, %228 : vector<16x128xf32>
    %cst_41 = arith.constant 0.0111111114 : f32
    %235 = vector.broadcast %cst_41 : f32 to vector<16x128xf32>
    %236 = arith.mulf %235, %232 : vector<16x128xf32>
    %237 = arith.addf %234, %236 : vector<16x128xf32>
    %238 = arith.mulf %222, %237 : vector<16x128xf32>
    %cst_42 = arith.constant dense<0.000000e+00> : vector<16xf32>
    %239 = vector.multi_reduction <add>, %238, %cst_42 [1] : vector<16x128xf32> to vector<16xf32>
    %240 = vector.shape_cast %239 : vector<16xf32> to vector<16x1xf32>
    %cst_43 = arith.constant 0.000000e+00 : f32
    %241 = vector.broadcast %cst_43 : f32 to vector<16x1xf32>
    %242 = arith.subf %241, %240 : vector<16x1xf32>
    %c0_i32 = arith.constant 0 : i32
    %243 = vector.broadcast %c0_i32 : i32 to vector<16x1xi32>
    %244 = arith.cmpi sgt, %223, %243 : vector<16x1xi32>
    %245 = arith.extui %244 : vector<16x1xi1> to vector<16x1xi32>
    %246 = arith.sitofp %245 : vector<16x1xi32> to vector<16x1xf32>
    %247 = arith.mulf %246, %242 : vector<16x1xf32>
    %248 = vector.shape_cast %247 : vector<16x1xf32> to vector<1x16x1xf32>
    %cst_44 = arith.constant dense<0.000000e+00> : vector<1xf32>
    %249 = vector.multi_reduction <add>, %248, %cst_44 [1, 2] : vector<1x16x1xf32> to vector<1xf32>
    %250 = vector.shape_cast %249 : vector<1xf32> to vector<1x1x1xf32>
    %251 = vector.extract %250[0, 0, 0] : f32 from vector<1x1x1xf32>
    %252 = vector.broadcast %251 : f32 to vector<1x1xf32>
    %cst_45 = arith.constant dense<0xFF800000> : vector<16xf32>
    %253 = vector.multi_reduction <maximumf>, %222, %cst_45 [1] : vector<16x128xf32> to vector<16xf32>
    %254 = vector.shape_cast %253 : vector<16xf32> to vector<16x1xf32>
    %255 = vector.broadcast %254 : vector<16x1xf32> to vector<16x128xf32>
    %256 = arith.cmpf oeq, %222, %255 : vector<16x128xf32>
    %c128_i32 = arith.constant 128 : i32
    %257 = vector.broadcast %c128_i32 : i32 to vector<16x128xi32>
    %258 = arith.select %256, %224, %257 : vector<16x128xi1>, vector<16x128xi32>
    %cst_46 = arith.constant dense<2147483647> : vector<16xi32>
    %259 = vector.multi_reduction <minsi>, %258, %cst_46 [1] : vector<16x128xi32> to vector<16xi32>
    %260 = vector.shape_cast %259 : vector<16xi32> to vector<16x1xi32>
    %261 = arith.cmpi eq, %260, %223 : vector<16x1xi32>
    %262 = arith.extui %261 : vector<16x1xi1> to vector<16x1xi32>
    %263 = arith.sitofp %262 : vector<16x1xi32> to vector<16x1xf32>
    %264 = arith.mulf %246, %263 : vector<16x1xf32>
    %265 = vector.shape_cast %264 : vector<16x1xf32> to vector<1x16x1xf32>
    %cst_47 = arith.constant dense<0.000000e+00> : vector<1xf32>
    %266 = vector.multi_reduction <add>, %265, %cst_47 [1, 2] : vector<1x16x1xf32> to vector<1xf32>
    %267 = vector.shape_cast %266 : vector<1xf32> to vector<1x1x1xf32>
    %268 = vector.extract %267[0, 0, 0] : f32 from vector<1x1x1xf32>
    %269 = vector.broadcast %268 : f32 to vector<1x1xf32>
    %270 = tpu.concatenate %252, %269 in 1 : vector<1x1xf32>, vector<1x1xf32> -> vector<1x2xf32>
    %c0_48 = arith.constant 0 : index
    %c0_49 = arith.constant 0 : index
    %271 = vector.load %arg5[%c0_48, %c0_49] : memref<1x2xf32, #tpu.memory_space<vmem>>, vector<1x2xf32>
    tpu.vector_store %arg5[%c0_48, %c0_49], %270 {strides = array<i32>} : memref<1x2xf32, #tpu.memory_space<vmem>>, vector<1x2xf32>,
    %c0_50 = arith.constant 0 : index
    %c0_51 = arith.constant 0 : index
    %272 = vector.load %arg6[%c0_50, %c0_51] : memref<16x1xi32, #tpu.memory_space<vmem>>, vector<16x1xi32>
    tpu.vector_store %arg6[%c0_50, %c0_51], %260 {strides = array<i32>} : memref<16x1xi32, #tpu.memory_space<vmem>>, vector<16x1xi32>,
    return
  }
}

</mosaic_0001>

<llo_original>
// kernel: tpu_custom_call.1
$region0: #{tpu_custom_call.1}
  #allocation0 [shape = 'u32[]', space=smem, size = 0x4, offset = 0x4, fixed_abs, tag = 'smem constant byte address 0x4 - core index']
  #allocation1 [shape = 'u32[72,128]{1,0:T(1,128)}', space=vmem, size = 0x9000, scoped, tag = 'internal scratch']
  %s0 = inlined_call_operand.vmem [shape: f32[16,64], index: 0, kind: input, shape index: {}]
  %s1 = inlined_call_operand.hbm [shape: f32[96,96], index: 1, kind: input, shape index: {}]
  %s2 = inlined_call_operand.vmem [shape: f32[1,128], index: 2, kind: input, shape index: {}]
  %s3 = inlined_call_operand.hbm [shape: f32[33,128], index: 3, kind: input, shape index: {}]
  %s4 = inlined_call_operand.vmem [shape: s32[16,1], index: 4, kind: input, shape index: {}]
  %s5 = inlined_call_operand.hbm [shape: f32[1,2], index: 5, kind: output, shape index: {0}]
  %s6 = inlined_call_operand.vmem [shape: s32[16,1], index: 6, kind: output, shape index: {1}]
  %7 = xla_tuple %s5, %s6
  %s8 = sld [smem:[#allocation0]]
  $region46: #{tpu_custom_call.1} parent=0
    _
  %s10 = ssub.s32 1, %s8
  %s11 = scalar_select 0, %s10, %s8
  $region1: #{tpu_custom_call.1} parent=0
    #allocation2 [shape = 'u8[49152]{0}', space=vmem, size = 0xc000, scoped, tag = 'input window, operand 1, single buffered']
    #allocation3 [shape = 's32[1]{0}', space=sflag, size = 0x4, scoped, tag = 'scoped memory for tpu_custom_call.1']
    #allocation4 [shape = 's32[1]{0}', space=sflag, size = 0x4, scoped, tag = 'scoped memory for tpu_custom_call.1']
    #allocation5 [shape = 'u8[20480]{0}', space=vmem, size = 0x5000, scoped, tag = 'input window, operand 3, single buffered']
    #allocation6 [shape = 's32[1]{0}', space=sflag, size = 0x4, scoped, tag = 'scoped memory for tpu_custom_call.1']
    #allocation7 [shape = 'u8[512]{0}', space=vmem, size = 0x400, scoped, tag = 'output window, operand 0, single buffered']
    %12 = vsyncpa [#allocation3], 0
    %13 = vsyncpa [#allocation6], 0
    %14 = vsyncpa [#allocation4], 0
    // Predicated region
    $region2: #{tpu_custom_call.1} parent=1 // pred_check
      _
    $region3: #{tpu_custom_call.1} parent=1 // pred_check_branch
      %16 = sbr.rel (0) target = $region5
    $region4: #{tpu_custom_call.1} parent=1 // pred_region
      _
    $region5: #{tpu_custom_call.1} parent=1 // pred_fallthru
      _
    // Predicated region
    $region6: #{tpu_custom_call.1} parent=1 // pred_check
      _
    $region7: #{tpu_custom_call.1} parent=1 // pred_check_branch
      %18 = sbr.rel (0) target = $region9
    $region8: #{tpu_custom_call.1} parent=1 // pred_region
      %20 = vsyncadd [#allocation3], 0
      %s21 = sshll.u32 %s1, 4
      %s22 = int_to_ptr.hbm [resolvable:$true] %s21
      %s23 = sshll.u32 [#allocation2], 4
      %s24 = int_to_ptr.vmem [resolvable:$true] %s23
      %29 = dma.hbm_to_vmem [thread:$0]  %s22, 1536, %s24, [#allocation3], 128, 128, 8
    $region9: #{tpu_custom_call.1} parent=1 // pred_fallthru
      _
    // Predicated region
    $region10: #{tpu_custom_call.1} parent=1 // pred_check
      _
    $region11: #{tpu_custom_call.1} parent=1 // pred_check_branch
      %31 = sbr.rel (0) target = $region13
    $region12: #{tpu_custom_call.1} parent=1 // pred_region
      _
    $region13: #{tpu_custom_call.1} parent=1 // pred_fallthru
      _
    // Predicated region
    $region14: #{tpu_custom_call.1} parent=1 // pred_check
      _
    $region15: #{tpu_custom_call.1} parent=1 // pred_check_branch
      %33 = sbr.rel (0) target = $region17
    $region16: #{tpu_custom_call.1} parent=1 // pred_region
      %35 = vsyncadd [#allocation6], 0
      %s36 = sshll.u32 %s3, 4
      %s37 = int_to_ptr.hbm [resolvable:$true] %s36
      %s38 = sshll.u32 [#allocation5], 4
      %s39 = int_to_ptr.vmem [resolvable:$true] %s38
      %44 = dma.hbm_to_vmem [thread:$0]  %s37, 640, %s39, [#allocation6], 128, 128, 8
    $region17: #{tpu_custom_call.1} parent=1 // pred_fallthru
      _
    // Predicated region
    $region18: #{tpu_custom_call.1} parent=1 // pred_check
      _
    $region19: #{tpu_custom_call.1} parent=1 // pred_check_branch
      %46 = sbr.rel (0) target = $region21
    $region20: #{tpu_custom_call.1} parent=1 // pred_region
      _
    $region21: #{tpu_custom_call.1} parent=1 // pred_fallthru
      _
    // Predicated region
    $region22: #{tpu_custom_call.1} parent=1 // pred_check
      _
    $region23: #{tpu_custom_call.1} parent=1 // pred_check_branch
      %48 = sbr.rel (0) target = $region25
    $region24: #{tpu_custom_call.1} parent=1 // pred_region
      %50 = dma.done [#allocation3], 1536
    $region25: #{tpu_custom_call.1} parent=1 // pred_fallthru
      _
    // Predicated region
    $region26: #{tpu_custom_call.1} parent=1 // pred_check
      _
    $region27: #{tpu_custom_call.1} parent=1 // pred_check_branch
      %52 = sbr.rel (0) target = $region29
    $region28: #{tpu_custom_call.1} parent=1 // pred_region
      %54 = dma.done [#allocation6], 640
    $region29: #{tpu_custom_call.1} parent=1 // pred_fallthru
      _
    %v55 = vld [vmem:[#allocation2] sm:$0xff]
    %v56 = vld [vmem:[#allocation2 + $0x8] sm:$0xff]
    %v57 = vld [vmem:[#allocation2 + $0x10] sm:$0xff]
    %v58 = vld [vmem:[#allocation2 + $0x18] sm:$0xff]
    %v59 = vld [vmem:[#allocation2 + $0x20] sm:$0xff]
    %v60 = vld [vmem:[#allocation2 + $0x28] sm:$0xff]
    %v61 = vld [vmem:[#allocation2 + $0x30] sm:$0xff]
    %v62 = vld [vmem:[#allocation2 + $0x38] sm:$0xff]
    %v63 = vld [vmem:[#allocation2 + $0x40] sm:$0xff]
    %v64 = vld [vmem:[#allocation2 + $0x48] sm:$0xff]
    %v65 = vld [vmem:[#allocation2 + $0x50] sm:$0xff]
    %v66 = vld [vmem:[#allocation2 + $0x58] sm:$0xff]
    %v67 = vld [vmem:[%s2] sm:$0x1]
    %v69 = vperm.slane %v67, 0
    %v70 = vld [vmem:[%s0] sm:$0xff]
    %v71 = vld [vmem:[%s0 + $0x8] sm:$0xff]
    %vm73 = vcmask 523264
    %v75 = vsel %vm73, %v70, 0
    %v78 = vsel %vm73, %v71, 0
    %80 = vmatpush.msra.mxu0 0.0
    %81 = vmatpush.msra.mxu0 0.0
    %82 = vmatpush.msra.mxu0 0.0
    %83 = vmatpush.msra.mxu0 0.0
    %84 = vmatpush.msra.mxu0 0.0
    %85 = vmatpush.msra.mxu0 0.0
    %86 = vmatpush.msra.mxu0 0.0
    %87 = vmatpush.msra.mxu0 0.0
    %88 = vmatpush.msra.mxu0 %v62
    %89 = vmatpush.msra.mxu0 %v61
    %90 = vmatpush.msra.mxu0 %v60
    %91 = vmatpush.msra.mxu0 %v59
    %92 = vmatpush.msra.mxu0 %v58
    %93 = vmatpush.msra.mxu0 %v57
    %94 = vmatpush.msra.mxu0 %v56
    %95 = vmatpush.msra.mxu0 %v55
    %96 = vmatmul.f32.gmra.mxu0 %v75
    %v97 = vpop.f32.mrf.mxu0
    %v98 = vadd.f32 %v69, %v97
    %99 = vmatmul.f32.gmra.mxu0 %v78
    %v100 = vpop.f32.mrf.mxu0
    %v101 = vadd.f32 %v69, %v100
    %102 = vdwg.mxu0
    %vm103 = vcmask 261120
    %v105 = vsel %vm103, 0.0, 0
    %107 = vmatpush.msra.mxu0 0.0
    %108 = vmatpush.msra.mxu0 0.0
    %109 = vmatpush.msra.mxu0 0.0
    %110 = vmatpush.msra.mxu0 0.0
    %111 = vmatpush.msra.mxu0 0.0
    %112 = vmatpush.msra.mxu0 0.0
    %113 = vmatpush.msra.mxu0 0.0
    %114 = vmatpush.msra.mxu0 0.0
    %115 = vmatpush.msra.mxu0 0.0
    %116 = vmatpush.msra.mxu0 0.0
    %117 = vmatpush.msra.mxu0 0.0
    %118 = vmatpush.msra.mxu0 0.0
    %119 = vmatpush.msra.mxu0 %v66
    %120 = vmatpush.msra.mxu0 %v65
    %121 = vmatpush.msra.mxu0 %v64
    %122 = vmatpush.msra.mxu0 %v63
    %123 = vmatmul.f32.gmra.mxu0 %v105
    %v124 = vpop.f32.mrf.mxu0
    %v125 = vadd.f32 0.0, %v124
    %126 = vdwg.mxu0
    %v127 = vadd.f32 %v98, %v125
    %v128 = vxor.u32 %v127, 2147483648
    %v129 = vmul.f32 %v128, 1.442695
    %v130 = vpow.pop %v129
    %v131 = vadd.f32 %v130, 1.0
    %v132 = vrcp.pop %v131
    %v133 = vmul.f32 %v131, %v132
    %v134 = vsub.f32 1.0, %v133
    %v135 = vmul.f32 %v132, %v134
    %v136 = vadd.f32 %v132, %v135
    %vm137 = vweird.f32 %v131
    %vm138 = vweird.f32 %v132
    %vm139 = vmor %vm137, %vm138
    %v140 = vsel %vm139, %v132, %v136
    %v141 = vand.u32 2147483647, %v131
    %vm142 = vcmp.eq.f32.partialorder %v141, 8.507059e+37
    %v143 = vand.u32 %v131, 2147483648
    %v144 = vor.u32 1.1754944e-38, %v143
    %v145 = vsel %vm142, %v144, %v140
    %v146 = vmul.f32 1.0, %v145
    %147 = vrot.lane.b32.xlu0 %v69, 96
    %v148 = vpop.permute.xlu0 %147
    %v150 = vadd.f32 %v125, %v148
    %152 = vrot.lane.b32.xlu0 %v150, 64
    %v153 = vpop.permute.xlu0 %152
    %v155 = vmul.f32 %v146, %v153
    %157 = vrot.lane.b32.xlu0 %v155, 64
    %v158 = vpop.permute.xlu0 %157
    %v160 = vadd.f32 %v98, %v158
    %v161 = vtanh.pop %v160
    %v162 = vsub.f32 1.0, %v146
    %164 = vrot.lane.b32.xlu0 %v161, 96
    %v165 = vpop.permute.xlu0 %164
    %v167 = vmul.f32 %v162, %v165
    %v168 = vmul.f32 %v146, 0.0
    %v169 = vadd.f32 %v167, %v168
    %171 = vrot.lane.b32.xlu0 %v169, 96
    %v172 = vpop.permute.xlu0 %171
    %v173 = vsel %vm103, %v172, 0
    %175 = vmatpush.msra.mxu0 0.0
    %176 = vmatpush.msra.mxu0 0.0
    %177 = vmatpush.msra.mxu0 0.0
    %178 = vmatpush.msra.mxu0 0.0
    %179 = vmatpush.msra.mxu0 0.0
    %180 = vmatpush.msra.mxu0 0.0
    %181 = vmatpush.msra.mxu0 0.0
    %182 = vmatpush.msra.mxu0 0.0
    %183 = vmatpush.msra.mxu0 0.0
    %184 = vmatpush.msra.mxu0 0.0
    %185 = vmatpush.msra.mxu0 0.0
    %186 = vmatpush.msra.mxu0 0.0
    %187 = vmatpush.msra.mxu0 %v66
    %188 = vmatpush.msra.mxu0 %v65
    %189 = vmatpush.msra.mxu0 %v64
    %190 = vmatpush.msra.mxu0 %v63
    %191 = vmatmul.f32.gmra.mxu0 %v173
    %v192 = vpop.f32.mrf.mxu0
    %v193 = vadd.f32 0.0, %v192
    %194 = vdwg.mxu0
    %v196 = vrot.slane %v193, 6
    %v198 = vadd.f32 %v98, %v196
    %v199 = vxor.u32 %v198, 2147483648
    %v200 = vmul.f32 %v199, 1.442695
    %v201 = vpow.pop %v200
    %v202 = vadd.f32 %v201, 1.0
    %v203 = vrcp.pop %v202
    %v204 = vmul.f32 %v202, %v203
    %v205 = vsub.f32 1.0, %v204
    %v206 = vmul.f32 %v203, %v205
    %v207 = vadd.f32 %v203, %v206
    %vm208 = vweird.f32 %v202
    %vm209 = vweird.f32 %v203
    %vm210 = vmor %vm208, %vm209
    %v211 = vsel %vm210, %v203, %v207
    %v212 = vand.u32 2147483647, %v202
    %vm213 = vcmp.eq.f32.partialorder %v212, 8.507059e+37
    %v214 = vand.u32 %v202, 2147483648
    %v215 = vor.u32 1.1754944e-38, %v214
    %v216 = vsel %vm213, %v215, %v211
    %v217 = vmul.f32 1.0, %v216
    %v218 = vadd.f32 %v193, %v148
    %v220 = vrot.slane %v218, 6
    %221 = vrot.lane.b32.xlu0 %v220, 64
    %v222 = vpop.permute.xlu0 %221
    %v224 = vmul.f32 %v217, %v222
    %226 = vrot.lane.b32.xlu0 %v224, 64
    %v227 = vpop.permute.xlu0 %226
    %v229 = vadd.f32 %v98, %v227
    %v230 = vtanh.pop %v229
    %v231 = vsub.f32 1.0, %v217
    %233 = vrot.lane.b32.xlu0 %v230, 96
    %v234 = vpop.permute.xlu0 %233
    %v236 = vmul.f32 %v231, %v234
    %v237 = vrot.slane %v169, 6
    %v239 = vmul.f32 %v217, %v237
    %v240 = vadd.f32 %v236, %v239
    %v242 = vrot.slane %v240, 2
    %243 = vrot.lane.b32.xlu0 %v242, 96
    %v244 = vpop.permute.xlu0 %243
    %v245 = vsel %vm103, %v244, 0
    %247 = vmatpush.msra.mxu0 0.0
    %248 = vmatpush.msra.mxu0 0.0
    %249 = vmatpush.msra.mxu0 0.0
    %250 = vmatpush.msra.mxu0 0.0
    %251 = vmatpush.msra.mxu0 0.0
    %252 = vmatpush.msra.mxu0 0.0
    %253 = vmatpush.msra.mxu0 0.0
    %254 = vmatpush.msra.mxu0 0.0
    %255 = vmatpush.msra.mxu0 0.0
    %256 = vmatpush.msra.mxu0 0.0
    %257 = vmatpush.msra.mxu0 0.0
    %258 = vmatpush.msra.mxu0 0.0
    %259 = vmatpush.msra.mxu0 %v66
    %260 = vmatpush.msra.mxu0 %v65
    %261 = vmatpush.msra.mxu0 %v64
    %262 = vmatpush.msra.mxu0 %v63
    %263 = vmatmul.f32.gmra.mxu0 %v245
    %v264 = vpop.f32.mrf.mxu0
    %v265 = vadd.f32 0.0, %v264
    %266 = vdwg.mxu0
    %v268 = vrot.slane %v265, 4
    %v270 = vadd.f32 %v98, %v268
    %v271 = vxor.u32 %v270, 2147483648
    %v272 = vmul.f32 %v271, 1.442695
    %v273 = vpow.pop %v272
    %v274 = vadd.f32 %v273, 1.0
    %v275 = vrcp.pop %v274
    %v276 = vmul.f32 %v274, %v275
    %v277 = vsub.f32 1.0, %v276
    %v278 = vmul.f32 %v275, %v277
    %v279 = vadd.f32 %v275, %v278
    %vm280 = vweird.f32 %v274
    %vm281 = vweird.f32 %v275
    %vm282 = vmor %vm280, %vm281
    %v283 = vsel %vm282, %v275, %v279
    %v284 = vand.u32 2147483647, %v274
    %vm285 = vcmp.eq.f32.partialorder %v284, 8.507059e+37
    %v286 = vand.u32 %v274, 2147483648
    %v287 = vor.u32 1.1754944e-38, %v286
    %v288 = vsel %vm285, %v287, %v283
    %v289 = vmul.f32 1.0, %v288
    %v290 = vadd.f32 %v265, %v148
    %v292 = vrot.slane %v290, 4
    %293 = vrot.lane.b32.xlu0 %v292, 64
    %v294 = vpop.permute.xlu0 %293
    %v296 = vmul.f32 %v289, %v294
    %298 = vrot.lane.b32.xlu0 %v296, 64
    %v299 = vpop.permute.xlu0 %298
    %v301 = vadd.f32 %v98, %v299
    %v302 = vtanh.pop %v301
    %v303 = vsub.f32 1.0, %v289
    %305 = vrot.lane.b32.xlu0 %v302, 96
    %v306 = vpop.permute.xlu0 %305
    %v308 = vmul.f32 %v303, %v306
    %v309 = vrot.slane %v240, 6
    %v311 = vmul.f32 %v289, %v309
    %v312 = vadd.f32 %v308, %v311
    %v314 = vrot.slane %v312, 4
    %315 = vrot.lane.b32.xlu0 %v314, 96
    %v316 = vpop.permute.xlu0 %315
    %v317 = vsel %vm103, %v316, 0
    %319 = vmatpush.msra.mxu0 0.0
    %320 = vmatpush.msra.mxu0 0.0
    %321 = vmatpush.msra.mxu0 0.0
    %322 = vmatpush.msra.mxu0 0.0
    %323 = vmatpush.msra.mxu0 0.0
    %324 = vmatpush.msra.mxu0 0.0
    %325 = vmatpush.msra.mxu0 0.0
    %326 = vmatpush.msra.mxu0 0.0
    %327 = vmatpush.msra.mxu0 0.0
    %328 = vmatpush.msra.mxu0 0.0
    %329 = vmatpush.msra.mxu0 0.0
    %330 = vmatpush.msra.mxu0 0.0
    %331 = vmatpush.msra.mxu0 %v66
    %332 = vmatpush.msra.mxu0 %v65
    %333 = vmatpush.msra.mxu0 %v64
    %334 = vmatpush.msra.mxu0 %v63
    %335 = vmatmul.f32.gmra.mxu0 %v317
    %v336 = vpop.f32.mrf.mxu0
    %v337 = vadd.f32 0.0, %v336
    %338 = vdwg.mxu0
    %v340 = vrot.slane %v337, 2
    %v342 = vadd.f32 %v98, %v340
    %v343 = vxor.u32 %v342, 2147483648
    %v344 = vmul.f32 %v343, 1.442695
    %v345 = vpow.pop %v344
    %v346 = vadd.f32 %v345, 1.0
    %v347 = vrcp.pop %v346
    %v348 = vmul.f32 %v346, %v347
    %v349 = vsub.f32 1.0, %v348
    %v350 = vmul.f32 %v347, %v349
    %v351 = vadd.f32 %v347, %v350
    %vm352 = vweird.f32 %v346
    %vm353 = vweird.f32 %v347
    %vm354 = vmor %vm352, %vm353
    %v355 = vsel %vm354, %v347, %v351
    %v356 = vand.u32 2147483647, %v346
    %vm357 = vcmp.eq.f32.partialorder %v356, 8.507059e+37
    %v358 = vand.u32 %v346, 2147483648
    %v359 = vor.u32 1.1754944e-38, %v358
    %v360 = vsel %vm357, %v359, %v355
    %v361 = vmul.f32 1.0, %v360
    %v362 = vadd.f32 %v337, %v148
    %v364 = vrot.slane %v362, 2
    %365 = vrot.lane.b32.xlu0 %v364, 64
    %v366 = vpop.permute.xlu0 %365
    %v368 = vmul.f32 %v361, %v366
    %370 = vrot.lane.b32.xlu0 %v368, 64
    %v371 = vpop.permute.xlu0 %370
    %v373 = vadd.f32 %v98, %v371
    %v374 = vtanh.pop %v373
    %v375 = vsub.f32 1.0, %v361
    %377 = vrot.lane.b32.xlu0 %v374, 96
    %v378 = vpop.permute.xlu0 %377
    %v380 = vmul.f32 %v375, %v378
    %v381 = vrot.slane %v312, 6
    %v383 = vmul.f32 %v361, %v381
    %v384 = vadd.f32 %v380, %v383
    %v386 = vrot.slane %v384, 6
    %387 = vrot.lane.b32.xlu0 %v386, 96
    %v388 = vpop.permute.xlu0 %387
    %v389 = vsel %vm103, %v388, 0
    %391 = vmatpush.msra.mxu0 0.0
    %392 = vmatpush.msra.mxu0 0.0
    %393 = vmatpush.msra.mxu0 0.0
    %394 = vmatpush.msra.mxu0 0.0
    %395 = vmatpush.msra.mxu0 0.0
    %396 = vmatpush.msra.mxu0 0.0
    %397 = vmatpush.msra.mxu0 0.0
    %398 = vmatpush.msra.mxu0 0.0
    %399 = vmatpush.msra.mxu0 0.0
    %400 = vmatpush.msra.mxu0 0.0
    %401 = vmatpush.msra.mxu0 0.0
    %402 = vmatpush.msra.mxu0 0.0
    %403 = vmatpush.msra.mxu0 %v66
    %404 = vmatpush.msra.mxu0 %v65
    %405 = vmatpush.msra.mxu0 %v64
    %406 = vmatpush.msra.mxu0 %v63
    %407 = vmatmul.f32.gmra.mxu0 %v389
    %v408 = vpop.f32.mrf.mxu0
    %v409 = vadd.f32 0.0, %v408
    %410 = vdwg.mxu0
    %v411 = vadd.f32 %v101, %v409
    %v412 = vxor.u32 %v411, 2147483648
    %v413 = vmul.f32 %v412, 1.442695
    %v414 = vpow.pop %v413
    %v415 = vadd.f32 %v414, 1.0
    %v416 = vrcp.pop %v415
    %v417 = vmul.f32 %v415, %v416
    %v418 = vsub.f32 1.0, %v417
    %v419 = vmul.f32 %v416, %v418
    %v420 = vadd.f32 %v416, %v419
    %vm421 = vweird.f32 %v415
    %vm422 = vweird.f32 %v416
    %vm423 = vmor %vm421, %vm422
    %v424 = vsel %vm423, %v416, %v420
    %v425 = vand.u32 2147483647, %v415
    %vm426 = vcmp.eq.f32.partialorder %v425, 8.507059e+37
    %v427 = vand.u32 %v415, 2147483648
    %v428 = vor.u32 1.1754944e-38, %v427
    %v429 = vsel %vm426, %v428, %v424
    %v430 = vmul.f32 1.0, %v429
    %v431 = vadd.f32 %v409, %v148
    %433 = vrot.lane.b32.xlu0 %v431, 64
    %v434 = vpop.permute.xlu0 %433
    %v436 = vmul.f32 %v430, %v434
    %438 = vrot.lane.b32.xlu0 %v436, 64
    %v439 = vpop.permute.xlu0 %438
    %v441 = vadd.f32 %v101, %v439
    %v442 = vtanh.pop %v441
    %v443 = vsub.f32 1.0, %v430
    %445 = vrot.lane.b32.xlu0 %v442, 96
    %v446 = vpop.permute.xlu0 %445
    %v448 = vmul.f32 %v443, %v446
    %v450 = vmul.f32 %v430, %v386
    %v451 = vadd.f32 %v448, %v450
    %453 = vrot.lane.b32.xlu0 %v451, 96
    %v454 = vpop.permute.xlu0 %453
    %v455 = vsel %vm103, %v454, 0
    %457 = vmatpush.msra.mxu0 0.0
    %458 = vmatpush.msra.mxu0 0.0
    %459 = vmatpush.msra.mxu0 0.0
    %460 = vmatpush.msra.mxu0 0.0
    %461 = vmatpush.msra.mxu0 0.0
    %462 = vmatpush.msra.mxu0 0.0
    %463 = vmatpush.msra.mxu0 0.0
    %464 = vmatpush.msra.mxu0 0.0
    %465 = vmatpush.msra.mxu0 0.0
    %466 = vmatpush.msra.mxu0 0.0
    %467 = vmatpush.msra.mxu0 0.0
    %468 = vmatpush.msra.mxu0 0.0
    %469 = vmatpush.msra.mxu0 %v66
    %470 = vmatpush.msra.mxu0 %v65
    %471 = vmatpush.msra.mxu0 %v64
    %472 = vmatpush.msra.mxu0 %v63
    %473 = vmatmul.f32.gmra.mxu0 %v455
    %v474 = vpop.f32.mrf.mxu0
    %v475 = vadd.f32 0.0, %v474
    %476 = vdwg.mxu0
    %v478 = vrot.slane %v475, 6
    %v480 = vadd.f32 %v101, %v478
    %v481 = vxor.u32 %v480, 2147483648
    %v482 = vmul.f32 %v481, 1.442695
    %v483 = vpow.pop %v482
    %v484 = vadd.f32 %v483, 1.0
    %v485 = vrcp.pop %v484
    %v486 = vmul.f32 %v484, %v485
    %v487 = vsub.f32 1.0, %v486
    %v488 = vmul.f32 %v485, %v487
    %v489 = vadd.f32 %v485, %v488
    %vm490 = vweird.f32 %v484
    %vm491 = vweird.f32 %v485
    %vm492 = vmor %vm490, %vm491
    %v493 = vsel %vm492, %v485, %v489
    %v494 = vand.u32 2147483647, %v484
    %vm495 = vcmp.eq.f32.partialorder %v494, 8.507059e+37
    %v496 = vand.u32 %v484, 2147483648
    %v497 = vor.u32 1.1754944e-38, %v496
    %v498 = vsel %vm495, %v497, %v493
    %v499 = vmul.f32 1.0, %v498
    %v500 = vadd.f32 %v475, %v148
    %v502 = vrot.slane %v500, 6
    %503 = vrot.lane.b32.xlu0 %v502, 64
    %v504 = vpop.permute.xlu0 %503
    %v506 = vmul.f32 %v499, %v504
    %508 = vrot.lane.b32.xlu0 %v506, 64
    %v509 = vpop.permute.xlu0 %508
    %v511 = vadd.f32 %v101, %v509
    %v512 = vtanh.pop %v511
    %v513 = vsub.f32 1.0, %v499
    %515 = vrot.lane.b32.xlu0 %v512, 96
    %v516 = vpop.permute.xlu0 %515
    %v518 = vmul.f32 %v513, %v516
    %v519 = vrot.slane %v451, 6
    %v521 = vmul.f32 %v499, %v519
    %v522 = vadd.f32 %v518, %v521
    %v524 = vrot.slane %v522, 2
    %525 = vrot.lane.b32.xlu0 %v524, 96
    %v526 = vpop.permute.xlu0 %525
    %v527 = vsel %vm103, %v526, 0
    %529 = vmatpush.msra.mxu0 0.0
    %530 = vmatpush.msra.mxu0 0.0
    %531 = vmatpush.msra.mxu0 0.0
    %532 = vmatpush.msra.mxu0 0.0
    %533 = vmatpush.msra.mxu0 0.0
    %534 = vmatpush.msra.mxu0 0.0
    %535 = vmatpush.msra.mxu0 0.0
    %536 = vmatpush.msra.mxu0 0.0
    %537 = vmatpush.msra.mxu0 0.0
    %538 = vmatpush.msra.mxu0 0.0
    %539 = vmatpush.msra.mxu0 0.0
    %540 = vmatpush.msra.mxu0 0.0
    %541 = vmatpush.msra.mxu0 %v66
    %542 = vmatpush.msra.mxu0 %v65
    %543 = vmatpush.msra.mxu0 %v64
    %544 = vmatpush.msra.mxu0 %v63
    %545 = vmatmul.f32.gmra.mxu0 %v527
    %v546 = vpop.f32.mrf.mxu0
    %v547 = vadd.f32 0.0, %v546
    %548 = vdwg.mxu0
    %v550 = vrot.slane %v547, 4
    %v552 = vadd.f32 %v101, %v550
    %v553 = vxor.u32 %v552, 2147483648
    %v554 = vmul.f32 %v553, 1.442695
    %v555 = vpow.pop %v554
    %v556 = vadd.f32 %v555, 1.0
    %v557 = vrcp.pop %v556
    %v558 = vmul.f32 %v556, %v557
    %v559 = vsub.f32 1.0, %v558
    %v560 = vmul.f32 %v557, %v559
    %v561 = vadd.f32 %v557, %v560
    %vm562 = vweird.f32 %v556
    %vm563 = vweird.f32 %v557
    %vm564 = vmor %vm562, %vm563
    %v565 = vsel %vm564, %v557, %v561
    %v566 = vand.u32 2147483647, %v556
    %vm567 = vcmp.eq.f32.partialorder %v566, 8.507059e+37
    %v568 = vand.u32 %v556, 2147483648
    %v569 = vor.u32 1.1754944e-38, %v568
    %v570 = vsel %vm567, %v569, %v565
    %v571 = vmul.f32 1.0, %v570
    %v572 = vadd.f32 %v547, %v148
    %v574 = vrot.slane %v572, 4
    %575 = vrot.lane.b32.xlu0 %v574, 64
    %v576 = vpop.permute.xlu0 %575
    %v578 = vmul.f32 %v571, %v576
    %580 = vrot.lane.b32.xlu0 %v578, 64
    %v581 = vpop.permute.xlu0 %580
    %v583 = vadd.f32 %v101, %v581
    %v584 = vtanh.pop %v583
    %v585 = vsub.f32 1.0, %v571
    %587 = vrot.lane.b32.xlu0 %v584, 96
    %v588 = vpop.permute.xlu0 %587
    %v590 = vmul.f32 %v585, %v588
    %v591 = vrot.slane %v522, 6
    %v593 = vmul.f32 %v571, %v591
    %v594 = vadd.f32 %v590, %v593
    %v596 = vrot.slane %v594, 4
    %597 = vrot.lane.b32.xlu0 %v596, 96
    %v598 = vpop.permute.xlu0 %597
    %v599 = vsel %vm103, %v598, 0
    %601 = vmatpush.msra.mxu0 0.0
    %602 = vmatpush.msra.mxu0 0.0
    %603 = vmatpush.msra.mxu0 0.0
    %604 = vmatpush.msra.mxu0 0.0
    %605 = vmatpush.msra.mxu0 0.0
    %606 = vmatpush.msra.mxu0 0.0
    %607 = vmatpush.msra.mxu0 0.0
    %608 = vmatpush.msra.mxu0 0.0
    %609 = vmatpush.msra.mxu0 0.0
    %610 = vmatpush.msra.mxu0 0.0
    %611 = vmatpush.msra.mxu0 0.0
    %612 = vmatpush.msra.mxu0 0.0
    %613 = vmatpush.msra.mxu0 %v66
    %614 = vmatpush.msra.mxu0 %v65
    %615 = vmatpush.msra.mxu0 %v64
    %616 = vmatpush.msra.mxu0 %v63
    %617 = vmatmul.f32.gmra.mxu0 %v599
    %v618 = vpop.f32.mrf.mxu0
    %v619 = vadd.f32 0.0, %v618
    %620 = vdwg.mxu0
    %v622 = vrot.slane %v619, 2
    %v624 = vadd.f32 %v101, %v622
    %v625 = vxor.u32 %v624, 2147483648
    %v626 = vmul.f32 %v625, 1.442695
    %v627 = vpow.pop %v626
    %v628 = vadd.f32 %v627, 1.0
    %v629 = vrcp.pop %v628
    %v630 = vmul.f32 %v628, %v629
    %v631 = vsub.f32 1.0, %v630
    %v632 = vmul.f32 %v629, %v631
    %v633 = vadd.f32 %v629, %v632
    %vm634 = vweird.f32 %v628
    %vm635 = vweird.f32 %v629
    %vm636 = vmor %vm634, %vm635
    %v637 = vsel %vm636, %v629, %v633
    %v638 = vand.u32 2147483647, %v628
    %vm639 = vcmp.eq.f32.partialorder %v638, 8.507059e+37
    %v640 = vand.u32 %v628, 2147483648
    %v641 = vor.u32 1.1754944e-38, %v640
    %v642 = vsel %vm639, %v641, %v637
    %v643 = vmul.f32 1.0, %v642
    %v644 = vadd.f32 %v619, %v148
    %v646 = vrot.slane %v644, 2
    %647 = vrot.lane.b32.xlu0 %v646, 64
    %v648 = vpop.permute.xlu0 %647
    %v650 = vmul.f32 %v643, %v648
    %652 = vrot.lane.b32.xlu0 %v650, 64
    %v653 = vpop.permute.xlu0 %652
    %v655 = vadd.f32 %v101, %v653
    %v656 = vtanh.pop %v655
    %v657 = vsub.f32 1.0, %v643
    %659 = vrot.lane.b32.xlu0 %v656, 96
    %v660 = vpop.permute.xlu0 %659
    %v662 = vmul.f32 %v657, %v660
    %v663 = vrot.slane %v594, 6
    %v665 = vmul.f32 %v643, %v663
    %v666 = vadd.f32 %v662, %v665
    %v667 = vlaneseq
    %v668 = vand.u32 %v667, 127
    %vm669 = vcmp.lt.s32.totalorder %v668, 16
    %v672 = vrot.slane %v666, 6
    %673 = vrot.lane.b32.xlu0 %v672, 96
    %v674 = vpop.permute.xlu0 %673
    %v676 = vsel %vm669, %v172, %v674
    %v679 = vsel %vm669, %v244, %v598
    %v682 = vsel %vm669, %v316, %v526
    %v685 = vsel %vm669, %v388, %v454
    %v686 = vsel %vm669, %v454, %v388
    %v687 = vsel %vm669, %v526, %v316
    %v688 = vsel %vm669, %v598, %v244
    %v689 = vsel %vm669, %v674, %v172
    %v691 = vrot.slane %v679, 6
    %v694 = vrot.slane %v682, 4
    %v697 = vrot.slane %v685, 2
    %v700 = vrot.slane %v687, 6
    %v703 = vrot.slane %v688, 4
    %v706 = vrot.slane %v689, 2
    %vm708 = vcmask 1041408
    %v709 = vsel %vm708, %v676, %v691
    %vm710 = vcmask 1043456
    %v711 = vsel %vm710, %v709, %v694
    %vm712 = vcmask 1045504
    %v713 = vsel %vm712, %v711, %v697
    %v714 = vsel %vm708, %v686, %v700
    %v715 = vsel %vm710, %v714, %v703
    %v716 = vsel %vm712, %v715, %v706
    %v717 = vld [vmem:[#allocation5] sm:$0xff]
    %v718 = vld [vmem:[#allocation5 + $0x8] sm:$0xff]
    %v719 = vld [vmem:[#allocation5 + $0x10] sm:$0xff]
    %v720 = vld [vmem:[#allocation5 + $0x18] sm:$0xff]
    %v721 = vld [vmem:[#allocation5 + $0x20] sm:$0x1]
    %v722 = vperm.slane %v721, 0
    %v724 = vsel %vm103, %v713, 0
    %v727 = vsel %vm103, %v716, 0
    %729 = vmatpush.msra.mxu0 0.0
    %730 = vmatpush.msra.mxu0 0.0
    %731 = vmatpush.msra.mxu0 0.0
    %732 = vmatpush.msra.mxu0 0.0
    %733 = vmatpush.msra.mxu0 0.0
    %734 = vmatpush.msra.mxu0 0.0
    %735 = vmatpush.msra.mxu0 0.0
    %736 = vmatpush.msra.mxu0 0.0
    %737 = vmatpush.msra.mxu0 0.0
    %738 = vmatpush.msra.mxu0 0.0
    %739 = vmatpush.msra.mxu0 0.0
    %740 = vmatpush.msra.mxu0 0.0
    %741 = vmatpush.msra.mxu0 %v720
    %742 = vmatpush.msra.mxu0 %v719
    %743 = vmatpush.msra.mxu0 %v718
    %744 = vmatpush.msra.mxu0 %v717
    %745 = vmatmul.f32.gmra.mxu0 %v724
    %v746 = vpop.f32.mrf.mxu0
    %v747 = vadd.f32 %v722, %v746
    %748 = vmatmul.f32.gmra.mxu0 %v727
    %v749 = vpop.f32.mrf.mxu0
    %v750 = vadd.f32 %v722, %v749
    %751 = vdwg.mxu0
    %752 = vmax.xlane.f32.xlu0 %v747
    %v753 = vpop.xlane.xlu0 %752
    %754 = vmax.xlane.f32.xlu0 %v750
    %v755 = vpop.xlane.xlu0 %754
    %v756 = vsub.f32 %v747, %v753
    %v757 = vsub.f32 %v750, %v755
    %v758 = vmul.f32 %v756, 1.442695
    %v759 = vpow.pop %v758
    %v760 = vmul.f32 %v757, 1.442695
    %v761 = vpow.pop %v760
    %762 = vadd.xlane.f32.xlu0 %v759
    %v763 = vpop.xlane.xlu0 %762
    %764 = vadd.xlane.f32.xlu0 %v761
    %v765 = vpop.xlane.xlu0 %764
    %v766 = vlog2.pop %v763
    %v767 = vmul.f32 %v766, 0.6931472
    %v768 = vlog2.pop %v765
    %v769 = vmul.f32 %v768, 0.6931472
    %v770 = vadd.f32 %v753, %v767
    %v771 = vadd.f32 %v755, %v769
    %v772 = vsub.f32 %v747, %v770
    %v773 = vsub.f32 %v750, %v771
    %v774 = vld [vmem:[%s4] sm:$0xff]
    %v775 = vld [vmem:[%s4 + $0x8] sm:$0xff]
    %776 = vset.pattern.permute.xlu0 0
    %777 = vperm.xlu0 %776, %v774
    %v778 = vpop.permute.xlu0 %777
    %779 = vset.pattern.permute.xlu0 0
    %780 = vperm.xlu0 %779, %v775
    %v781 = vpop.permute.xlu0 %780
    %vm782 = vcmp.eq.s32.totalorder %v668, %v778
    %vm783 = vcmp.eq.s32.totalorder %v668, %v781
    %v784 = vsel %vm782, 1, 0
    %v785 = vsel %vm783, 1, 0
    %v786 = vcvt.s32.f32 %v784
    %v787 = vcvt.s32.f32 %v785
    %vm788 = vcmp.lt.s32.totalorder %v668, 9
    %v789 = vsel %vm788, 1, 0
    %v790 = vcvt.s32.f32 %v789
    %v791 = vmul.f32 %v786, 0.9
    %v792 = vmul.f32 %v787, 0.9
    %v793 = vmul.f32 %v790, 0.011111111
    %v794 = vadd.f32 %v791, %v793
    %v795 = vadd.f32 %v792, %v793
    %v796 = vmul.f32 %v772, %v794
    %v797 = vmul.f32 %v773, %v795
    %798 = vadd.xlane.f32.xlu0 %v796
    %v799 = vpop.xlane.xlu0 %798
    %800 = vadd.xlane.f32.xlu0 %v797
    %v801 = vpop.xlane.xlu0 %800
    %v802 = vsub.f32 0.0, %v799
    %v803 = vsub.f32 0.0, %v801
    %vm804 = vcmp.gt.s32.totalorder %v774, 0
    %vm805 = vcmp.gt.s32.totalorder %v775, 0
    %v806 = vsel %vm804, 1, 0
    %v807 = vsel %vm805, 1, 0
    %v808 = vcvt.s32.f32 %v806
    %v809 = vcvt.s32.f32 %v807
    %v810 = vmul.f32 %v808, %v802
    %v811 = vmul.f32 %v809, %v803
    %vm812 = vcmask 7168
    %v813 = vsel %vm812, %v810, 0.0
    %v814 = vsel %vm812, %v811, 0.0
    %v815 = vadd.f32 %v813, %v814
    %816 = vadd.xlane.f32.xlu0 %v815
    %v817 = vpop.xlane.xlu0 %816
    %v818 = vrot.slane %v817, 4
    %v819 = vadd.f32 %v817, %v818
    %v820 = vrot.slane %v819, 2
    %v821 = vadd.f32 %v819, %v820
    %v822 = vrot.slane %v821, 1
    %v823 = vadd.f32 %v821, %v822
    %s824 = vtos %v823
    %v825 = vstv %s824
    %826 = vmax.xlane.f32.xlu0 %v772
    %v827 = vpop.xlane.xlu0 %826
    %828 = vmax.xlane.f32.xlu0 %v773
    %v829 = vpop.xlane.xlu0 %828
    %vm830 = vcmp.eq.f32.partialorder %v772, %v827
    %vm831 = vcmp.eq.f32.partialorder %v773, %v829
    %v832 = vsel %vm830, %v668, 128
    %v833 = vsel %vm831, %v668, 128
    %v834 = vand.u32 %v832, 65535
    %v835 = vshra.s32 %v832, 16
    %v836 = vcvt.s32.f32 %v834
    %v837 = vcvt.s32.f32 %v835
    %838 = vmin.xlane.f32.xlu0 %v837
    %v839 = vpop.xlane.xlu0 %838
    %vm840 = vcmp.eq.f32.partialorder %v837, %v839
    %v841 = vsel %vm840, %v836, inf
    %842 = vmin.xlane.f32.xlu0 %v841
    %v843 = vpop.xlane.xlu0 %842
    %v844 = vcvt.f32.s32 %v843
    %v845 = vcvt.f32.s32 %v839
    %v846 = vshll.u32 %v845, 16
    %v847 = vadd.s32 %v846, %v844
    %v848 = vand.u32 %v833, 65535
    %v849 = vshra.s32 %v833, 16
    %v850 = vcvt.s32.f32 %v848
    %v851 = vcvt.s32.f32 %v849
    %852 = vmin.xlane.f32.xlu0 %v851
    %v853 = vpop.xlane.xlu0 %852
    %vm854 = vcmp.eq.f32.partialorder %v851, %v853
    %v855 = vsel %vm854, %v850, inf
    %856 = vmin.xlane.f32.xlu0 %v855
    %v857 = vpop.xlane.xlu0 %856
    %v858 = vcvt.f32.s32 %v857
    %v859 = vcvt.f32.s32 %v853
    %v860 = vshll.u32 %v859, 16
    %v861 = vadd.s32 %v860, %v858
    %vm862 = vcmp.eq.s32.totalorder %v847, %v774
    %vm863 = vcmp.eq.s32.totalorder %v861, %v775
    %v864 = vsel %vm862, 1, 0
    %v865 = vsel %vm863, 1, 0
    %v866 = vcvt.s32.f32 %v864
    %v867 = vcvt.s32.f32 %v865
    %v868 = vmul.f32 %v808, %v866
    %v869 = vmul.f32 %v809, %v867
    %v870 = vsel %vm812, %v868, 0.0
    %v871 = vsel %vm812, %v869, 0.0
    %v872 = vadd.f32 %v870, %v871
    %873 = vadd.xlane.f32.xlu0 %v872
    %v874 = vpop.xlane.xlu0 %873
    %v875 = vrot.slane %v874, 4
    %v876 = vadd.f32 %v874, %v875
    %v877 = vrot.slane %v876, 2
    %v878 = vadd.f32 %v876, %v877
    %v879 = vrot.slane %v878, 1
    %v880 = vadd.f32 %v878, %v879
    %s881 = vtos %v880
    %v882 = vstv %s881
    %v883 = vsel %vm812, %v825, %v882
    %vm884 = vcmask 8192
    %885 = vst.msk [vmem:[#allocation7] sm:$0x1] %vm884, %v883
    %886 = vst.msk [vmem:[%s6] sm:$0xff] %vm812, %v847
    %887 = vst.msk [vmem:[%s6 + $0x8] sm:$0xff] %vm812, %v861
    // Predicated region
    $region30: #{tpu_custom_call.1} parent=1 // pred_check
      _
    $region31: #{tpu_custom_call.1} parent=1 // pred_check_branch
      %889 = sbr.rel (0) target = $region33
    $region32: #{tpu_custom_call.1} parent=1 // pred_region
      %891 = vsyncadd [#allocation4], 0
      %s893 = sshll.u32 [#allocation7], 4
      %s894 = int_to_ptr.vmem [resolvable:$true] %s893
      %s895 = sshll.u32 %s5, 4
      %s896 = int_to_ptr.hbm [resolvable:$true] %s895
      %898 = dma.vmem_to_hbm [thread:$0]  %s894, 16, %s896, [#allocation4]
    $region33: #{tpu_custom_call.1} parent=1 // pred_fallthru
      _
    // Predicated region
    $region34: #{tpu_custom_call.1} parent=1 // pred_check
      _
    $region35: #{tpu_custom_call.1} parent=1 // pred_check_branch
      %900 = sbr.rel (0) target = $region37
    $region36: #{tpu_custom_call.1} parent=1 // pred_region
      _
    $region37: #{tpu_custom_call.1} parent=1 // pred_fallthru
      _
    // Predicated region
    $region38: #{tpu_custom_call.1} parent=1 // pred_check
      _
    $region39: #{tpu_custom_call.1} parent=1 // pred_check_branch
      %902 = sbr.rel (0) target = $region41
    $region40: #{tpu_custom_call.1} parent=1 // pred_region
      %904 = dma.done [#allocation4], 16
    $region41: #{tpu_custom_call.1} parent=1 // pred_fallthru
      _
    // Predicated region
    $region42: #{tpu_custom_call.1} parent=1 // pred_check
      _
    $region43: #{tpu_custom_call.1} parent=1 // pred_check_branch
      %906 = sbr.rel (0) target = $region45
    $region44: #{tpu_custom_call.1} parent=1 // pred_region
      _
    $region45: #{tpu_custom_call.1} parent=1 // pred_fallthru
      _
    %907 = vsyncpa [#allocation3], 1
    %908 = vsyncpa [#allocation6], 1
    %909 = vsyncpa [#allocation4], 1

</llo_original>
